<compile_context>
chip_gen: v5e
topology: v5e:2x2
jax: 0.10.0
libtpu: 0.0.40
codegen_flags: <defaults>
</compile_context>

<pallas_src>
import math

import jax
import jax.numpy as jnp
from jax.experimental import pallas as pl
from jax.experimental.pallas import tpu as pltpu


def _vmem_capacity_bytes():
    """Physical VMEM of the current TPU generation (conservative fallback)."""
    try:
        return int(pltpu.get_tpu_info().vmem_capacity_bytes)
    except Exception:
        return 64 << 20  # v7x per-TensorCore size: safe lower bound everywhere


def _padded_block_bytes(shape, dtype):
    """(8,128)-tile-padded VMEM footprint of one block.

    Last dim -> lanes (pad to 128); second-to-last -> sublanes (pad to the
    dtype's sublane multiple: 8 for 4-byte, 16 for 2-byte, 32 for 1-byte).
    """
    itemsize = jnp.dtype(dtype).itemsize
    sub_mult = max(8, 32 // itemsize)
    *lead, sub, lane = shape
    lane_p = math.ceil(lane / 128) * 128
    sub_p = math.ceil(sub / sub_mult) * sub_mult
    lead_prod = 1
    for d in lead:
        lead_prod *= int(d)
    return lead_prod * sub_p * lane_p * itemsize


def _pick_c_tile(channels, x_h, x_w, h_out, w_out, dtype, budget_bytes):
    """Largest channel tile whose double-buffered in+out blocks fit the padded
    VMEM budget.  Tiles are either full C or a multiple of 128 dividing C (so
    the lane dim of every block stays dense).  Returns None if nothing fits."""

    def blocks_bytes(ct):
        return 2 * (_padded_block_bytes((x_h, x_w, ct), dtype)
                    + _padded_block_bytes((h_out, w_out, ct), dtype))

    candidates = [channels]
    if channels % 128 == 0:
        k = channels // 128
        candidates += [d * 128 for d in range(k, 0, -1) if k % d == 0]
    seen = set()
    candidates = [c for c in candidates if not (c in seen or seen.add(c))]

    c_tile = None
    for ct in candidates:
        if blocks_bytes(ct) <= budget_bytes:
            c_tile = ct
            break
    if c_tile is None:
        return None

    # Prefer >=2 lane-dense grid steps for large activations so the "parallel"
    # channel axis can shard across both v7x TensorCores (harmless on v5e/v6e:
    # blocks stay multi-MiB so the extra grid step is amortized).
    out_bytes = channels * h_out * w_out * jnp.dtype(dtype).itemsize
    if c_tile == channels and channels % 256 == 0 and out_bytes >= (4 << 20):
        c_tile = channels // 2
    return c_tile


def make_zero_padding(padding: int, channels: int, x_h: int, x_w: int,
                      *, small_input_fallback_bytes: int = 1 << 20):
    """Builds the ZeroPadding 'module'.

    The PyTorch __init__ allocates all-zero buffers pad_width [1,C,H,pad] and
    pad_height [1,C,pad,W+2*pad]; they are deterministic zeros, so the kernel
    writes the zero border directly instead of materializing them.

    small_input_fallback_bytes: activations smaller than this go through
    jnp.pad (pallas_call fixed overhead dominates for tiny tensors); pass 0 to
    force the Pallas path.
    """
    h_out = x_h + 2 * padding
    w_out = x_w + 2 * padding

    def forward(x):
        n, c, h, w = x.shape
        assert n == 1, "ZeroPadding buffers have batch dim 1 (torch.cat requires N==1)"
        assert c == channels and h == x_h and w == x_w

        if padding == 0:
            return x

        itemsize = jnp.dtype(x.dtype).itemsize
        in_bytes = channels * x_h * x_w * itemsize
        out_bytes = channels * h_out * w_out * itemsize

        def xla_pad(v):
            return jnp.pad(v, ((0, 0), (0, 0), (padding, padding), (padding, padding)))

        if in_bytes + out_bytes < small_input_fallback_bytes:
            return xla_pad(x)

        vmem_capacity = _vmem_capacity_bytes()
        budget = min(int(vmem_capacity * 0.35), 48 << 20)
        c_tile = _pick_c_tile(channels, x_h, x_w, h_out, w_out, x.dtype, budget)
        if c_tile is None:
            # Activation too large for a lane-dense channel-tiled block.
            # TODO(synk): tile spatially (or fuse the pad into the consumer conv)
            # instead of falling back to XLA for such sizes.
            return xla_pad(x)

        needed = 2 * (_padded_block_bytes((x_h, x_w, c_tile), x.dtype)
                      + _padded_block_bytes((h_out, w_out, c_tile), x.dtype))
        vmem_limit = int(min(vmem_capacity * 3 // 4,
                             max(2 * needed + (2 << 20), 16 << 20)))

        p = padding

        def kernel(x_ref, o_ref):
            # x_ref: (x_h, x_w, c_tile)   o_ref: (h_out, w_out, c_tile)
            # Zero-init the whole block once, then one lane-dense interior store.
            # (The interior double-write only touches VMEM; the HBM writeback is
            # a single block DMA either way.)
            o_ref[...] = jnp.zeros(o_ref.shape, o_ref.dtype)
            o_ref[p:p + x_h, p:p + x_w, :] = x_ref[...]

        # Channel-last so the trailing (lane) dim of every block is C.
        x_hwc = jnp.transpose(x[0], (1, 2, 0))  # (x_h, x_w, C)

        out_hwc = pl.pallas_call(
            kernel,
            out_shape=jax.ShapeDtypeStruct((h_out, w_out, channels), x.dtype),
            grid=(channels // c_tile,),
            in_specs=[pl.BlockSpec((x_h, x_w, c_tile), lambda ci: (0, 0, ci))],
            out_specs=pl.BlockSpec((h_out, w_out, c_tile), lambda ci: (0, 0, ci)),
            compiler_params=pltpu.CompilerParams(
                dimension_semantics=("parallel",),
                vmem_limit_bytes=vmem_limit,
            ),
            cost_estimate=pl.CostEstimate(
                flops=0,
                transcendentals=0,
                bytes_accessed=int(in_bytes + out_bytes),
            ),
        )(x_hwc)

        return jnp.transpose(out_hwc, (2, 0, 1))[None]  # (1, C, H_out, W_out)

    return forward


if __name__ == "__main__":
    padding = 2
    channels = 32
    x_h = 16
    x_w = 16

    key = jax.random.PRNGKey(0)
    x = jax.random.normal(key, (1, channels, x_h, x_w), dtype=jnp.float32)

    # small_input_fallback_bytes=0 forces the Pallas path even for this tiny
    # demo tensor (the default would short-circuit to jnp.pad).
    zero_pad = make_zero_padding(padding, channels, x_h, x_w,
                                 small_input_fallback_bytes=0)
    out = jax.block_until_ready(zero_pad(x))

    # Reference check against jnp.pad (same semantics as the torch.cat construction).
    ref = jnp.pad(x, ((0, 0), (0, 0), (padding, padding), (padding, padding)))
    assert out.shape == (1, channels, x_h + 2 * padding, x_w + 2 * padding)
    assert out.dtype == x.dtype
    assert jnp.array_equal(out, ref)

    print("KERNEL_OK")
</pallas_src>

<mosaic_0001>
module attributes {stable_mosaic.version = 11 : i64} {
  func.func @kernel(%arg0: i32, %arg1: memref<16x16x32xf32, #tpu.memory_space<vmem>>, %arg2: memref<20x20x32xf32, #tpu.memory_space<vmem>>) attributes {dimension_semantics = [#tpu.dimension_semantics<parallel>], iteration_bounds = array<i64: 1>, scalar_prefetch = 0 : i64, scratch_operands = 0 : i64, tpu.core_type = #tpu.core_type<tc>, window_params = [{transform_indices = @transform_0, window_bounds = array<i64: 16, 16, 32>}, {transform_indices = @transform_1, window_bounds = array<i64: 20, 20, 32>}]} {
    %cst = arith.constant 0.000000e+00 : f32
    %0 = vector.broadcast %cst : f32 to vector<20x20x32xf32>
    %c0 = arith.constant 0 : index
    %c0_0 = arith.constant 0 : index
    %c0_1 = arith.constant 0 : index
    %1 = vector.load %arg2[%c0, %c0_0, %c0_1] : memref<20x20x32xf32, #tpu.memory_space<vmem>>, vector<20x20x32xf32>
    tpu.vector_store %arg2[%c0, %c0_0, %c0_1], %0 {strides = array<i32>} : memref<20x20x32xf32, #tpu.memory_space<vmem>>, vector<20x20x32xf32>,
    %c0_2 = arith.constant 0 : index
    %c0_3 = arith.constant 0 : index
    %c0_4 = arith.constant 0 : index
    %2 = vector.load %arg1[%c0_2, %c0_3, %c0_4] : memref<16x16x32xf32, #tpu.memory_space<vmem>>, vector<16x16x32xf32>
    %c2 = arith.constant 2 : index
    %c2_5 = arith.constant 2 : index
    %c0_6 = arith.constant 0 : index
    %3 = vector.load %arg2[%c2, %c2_5, %c0_6] : memref<20x20x32xf32, #tpu.memory_space<vmem>>, vector<16x16x32xf32>
    tpu.vector_store %arg2[%c2, %c2_5, %c0_6], %2 {strides = array<i32>} : memref<20x20x32xf32, #tpu.memory_space<vmem>>, vector<16x16x32xf32>,
    return
  }
  func.func @transform_0(%arg0: i32) -> (i32, i32, i32) {
    %c0_i32 = arith.constant 0 : i32
    %c0_i32_0 = arith.constant 0 : i32
    %c0_i32_1 = arith.constant 0 : i32
    return %c0_i32, %c0_i32_0, %arg0 : i32, i32, i32
  }
  func.func @transform_1(%arg0: i32) -> (i32, i32, i32) {
    %c0_i32 = arith.constant 0 : i32
    %c0_i32_0 = arith.constant 0 : i32
    %c0_i32_1 = arith.constant 0 : i32
    return %c0_i32, %c0_i32_0, %arg0 : i32, i32, i32
  }
}

</mosaic_0001>

<llo_original>
// kernel: tpu_custom_call.1
$region0: #{tpu_custom_call.1}
  #allocation0 [shape = 'u32[]', space=smem, size = 0x4, offset = 0x4, fixed_abs, tag = 'smem constant byte address 0x4 - core index']
  #allocation1 [shape = 'u32[72,128]{1,0:T(1,128)}', space=vmem, size = 0x9000, scoped, tag = 'internal scratch']
  %s0 = inlined_call_operand.hbm [shape: f32[16,16,32], index: 0, kind: input, shape index: {}]
  %s1 = inlined_call_operand.hbm [shape: f32[20,20,32], index: 1, kind: output, shape index: {}]
  %s2 = sld [smem:[#allocation0]]
  $region18: #{tpu_custom_call.1} parent=0
    _
  %s4 = ssub.s32 1, %s2
  %s5 = scalar_select 0, %s4, %s2
  $region1: #{tpu_custom_call.1} parent=0
    #allocation2 [shape = 'u8[131072]{0}', space=vmem, size = 0x20000, scoped, tag = 'input window, operand 0, single buffered']
    #allocation3 [shape = 's32[1]{0}', space=sflag, size = 0x4, scoped, tag = 'scoped memory for tpu_custom_call.1']
    #allocation4 [shape = 's32[1]{0}', space=sflag, size = 0x4, scoped, tag = 'scoped memory for tpu_custom_call.1']
    #allocation5 [shape = 'u8[245760]{0}', space=vmem, size = 0x3c000, scoped, tag = 'output window, operand 0, single buffered']
    %6 = vsyncpa [#allocation3], 0
    %7 = vsyncpa [#allocation4], 0
    // Predicated region
    $region2: #{tpu_custom_call.1} parent=1 // pred_check
      _
    $region3: #{tpu_custom_call.1} parent=1 // pred_check_branch
      %9 = sbr.rel (0) target = $region5
    $region4: #{tpu_custom_call.1} parent=1 // pred_region
      %11 = vsyncadd [#allocation3], 0
      %s12 = sshll.u32 %s0, 4
      %s13 = int_to_ptr.hbm [resolvable:$true] %s12
      %s14 = sshll.u32 [#allocation2], 4
      %s15 = int_to_ptr.vmem [resolvable:$true] %s14
      %20 = dma.hbm_to_vmem [thread:$0]  %s13, 4096, %s15, [#allocation3], 128, 128, 8
    $region5: #{tpu_custom_call.1} parent=1 // pred_fallthru
      _
    // Predicated region
    $region6: #{tpu_custom_call.1} parent=1 // pred_check
      _
    $region7: #{tpu_custom_call.1} parent=1 // pred_check_branch
      %22 = sbr.rel (0) target = $region9
    $region8: #{tpu_custom_call.1} parent=1 // pred_region
      %24 = dma.done [#allocation3], 4096
    $region9: #{tpu_custom_call.1} parent=1 // pred_fallthru
      _
    %vm25 = vcmask 261120
    %26 = vst.msk [vmem:[#allocation5] sm:$0xff] %vm25, 0.0
    %27 = vst.msk [vmem:[#allocation5 + $0x8] sm:$0xff] %vm25, 0.0
    %vm28 = vcmask 257024
    %29 = vst.msk [vmem:[#allocation5 + $0x10] sm:$0xf] %vm28, 0.0
    %30 = vst.msk [vmem:[#allocation5 + $0x18] sm:$0xff] %vm25, 0.0
    %31 = vst.msk [vmem:[#allocation5 + $0x20] sm:$0xff] %vm25, 0.0
    %32 = vst.msk [vmem:[#allocation5 + $0x28] sm:$0xf] %vm28, 0.0
    %33 = vst.msk [vmem:[#allocation5 + $0x30] sm:$0xff] %vm25, 0.0
    %34 = vst.msk [vmem:[#allocation5 + $0x38] sm:$0xff] %vm25, 0.0
    %35 = vst.msk [vmem:[#allocation5 + $0x40] sm:$0xf] %vm28, 0.0
    %36 = vst.msk [vmem:[#allocation5 + $0x48] sm:$0xff] %vm25, 0.0
    %37 = vst.msk [vmem:[#allocation5 + $0x50] sm:$0xff] %vm25, 0.0
    %38 = vst.msk [vmem:[#allocation5 + $0x58] sm:$0xf] %vm28, 0.0
    %39 = vst.msk [vmem:[#allocation5 + $0x60] sm:$0xff] %vm25, 0.0
    %40 = vst.msk [vmem:[#allocation5 + $0x68] sm:$0xff] %vm25, 0.0
    %41 = vst.msk [vmem:[#allocation5 + $0x70] sm:$0xf] %vm28, 0.0
    %42 = vst.msk [vmem:[#allocation5 + $0x78] sm:$0xff] %vm25, 0.0
    %43 = vst.msk [vmem:[#allocation5 + $0x80] sm:$0xff] %vm25, 0.0
    %44 = vst.msk [vmem:[#allocation5 + $0x88] sm:$0xf] %vm28, 0.0
    %45 = vst.msk [vmem:[#allocation5 + $0x90] sm:$0xff] %vm25, 0.0
    %46 = vst.msk [vmem:[#allocation5 + $0x98] sm:$0xff] %vm25, 0.0
    %47 = vst.msk [vmem:[#allocation5 + $0xa0] sm:$0xf] %vm28, 0.0
    %48 = vst.msk [vmem:[#allocation5 + $0xa8] sm:$0xff] %vm25, 0.0
    %49 = vst.msk [vmem:[#allocation5 + $0xb0] sm:$0xff] %vm25, 0.0
    %50 = vst.msk [vmem:[#allocation5 + $0xb8] sm:$0xf] %vm28, 0.0
    %51 = vst.msk [vmem:[#allocation5 + $0xc0] sm:$0xff] %vm25, 0.0
    %52 = vst.msk [vmem:[#allocation5 + $0xc8] sm:$0xff] %vm25, 0.0
    %53 = vst.msk [vmem:[#allocation5 + $0xd0] sm:$0xf] %vm28, 0.0
    %54 = vst.msk [vmem:[#allocation5 + $0xd8] sm:$0xff] %vm25, 0.0
    %55 = vst.msk [vmem:[#allocation5 + $0xe0] sm:$0xff] %vm25, 0.0
    %56 = vst.msk [vmem:[#allocation5 + $0xe8] sm:$0xf] %vm28, 0.0
    %57 = vst.msk [vmem:[#allocation5 + $0xf0] sm:$0xff] %vm25, 0.0
    %58 = vst.msk [vmem:[#allocation5 + $0xf8] sm:$0xff] %vm25, 0.0
    %59 = vst.msk [vmem:[#allocation5 + $0x100] sm:$0xf] %vm28, 0.0
    %60 = vst.msk [vmem:[#allocation5 + $0x108] sm:$0xff] %vm25, 0.0
    %61 = vst.msk [vmem:[#allocation5 + $0x110] sm:$0xff] %vm25, 0.0
    %62 = vst.msk [vmem:[#allocation5 + $0x118] sm:$0xf] %vm28, 0.0
    %63 = vst.msk [vmem:[#allocation5 + $0x120] sm:$0xff] %vm25, 0.0
    %64 = vst.msk [vmem:[#allocation5 + $0x128] sm:$0xff] %vm25, 0.0
    %65 = vst.msk [vmem:[#allocation5 + $0x130] sm:$0xf] %vm28, 0.0
    %66 = vst.msk [vmem:[#allocation5 + $0x138] sm:$0xff] %vm25, 0.0
    %67 = vst.msk [vmem:[#allocation5 + $0x140] sm:$0xff] %vm25, 0.0
    %68 = vst.msk [vmem:[#allocation5 + $0x148] sm:$0xf] %vm28, 0.0
    %69 = vst.msk [vmem:[#allocation5 + $0x150] sm:$0xff] %vm25, 0.0
    %70 = vst.msk [vmem:[#allocation5 + $0x158] sm:$0xff] %vm25, 0.0
    %71 = vst.msk [vmem:[#allocation5 + $0x160] sm:$0xf] %vm28, 0.0
    %72 = vst.msk [vmem:[#allocation5 + $0x168] sm:$0xff] %vm25, 0.0
    %73 = vst.msk [vmem:[#allocation5 + $0x170] sm:$0xff] %vm25, 0.0
    %74 = vst.msk [vmem:[#allocation5 + $0x178] sm:$0xf] %vm28, 0.0
    %75 = vst.msk [vmem:[#allocation5 + $0x180] sm:$0xff] %vm25, 0.0
    %76 = vst.msk [vmem:[#allocation5 + $0x188] sm:$0xff] %vm25, 0.0
    %77 = vst.msk [vmem:[#allocation5 + $0x190] sm:$0xf] %vm28, 0.0
    %78 = vst.msk [vmem:[#allocation5 + $0x198] sm:$0xff] %vm25, 0.0
    %79 = vst.msk [vmem:[#allocation5 + $0x1a0] sm:$0xff] %vm25, 0.0
    %80 = vst.msk [vmem:[#allocation5 + $0x1a8] sm:$0xf] %vm28, 0.0
    %81 = vst.msk [vmem:[#allocation5 + $0x1b0] sm:$0xff] %vm25, 0.0
    %82 = vst.msk [vmem:[#allocation5 + $0x1b8] sm:$0xff] %vm25, 0.0
    %83 = vst.msk [vmem:[#allocation5 + $0x1c0] sm:$0xf] %vm28, 0.0
    %84 = vst.msk [vmem:[#allocation5 + $0x1c8] sm:$0xff] %vm25, 0.0
    %85 = vst.msk [vmem:[#allocation5 + $0x1d0] sm:$0xff] %vm25, 0.0
    %86 = vst.msk [vmem:[#allocation5 + $0x1d8] sm:$0xf] %vm28, 0.0
    %v87 = vld [vmem:[#allocation2] sm:$0xff]
    %v88 = vld [vmem:[#allocation2 + $0x8] sm:$0xff]
    %v89 = vld [vmem:[#allocation2 + $0x10] sm:$0xff]
    %v90 = vld [vmem:[#allocation2 + $0x18] sm:$0xff]
    %v91 = vld [vmem:[#allocation2 + $0x20] sm:$0xff]
    %v92 = vld [vmem:[#allocation2 + $0x28] sm:$0xff]
    %v93 = vld [vmem:[#allocation2 + $0x30] sm:$0xff]
    %v94 = vld [vmem:[#allocation2 + $0x38] sm:$0xff]
    %v95 = vld [vmem:[#allocation2 + $0x40] sm:$0xff]
    %v96 = vld [vmem:[#allocation2 + $0x48] sm:$0xff]
    %v97 = vld [vmem:[#allocation2 + $0x50] sm:$0xff]
    %v98 = vld [vmem:[#allocation2 + $0x58] sm:$0xff]
    %v99 = vld [vmem:[#allocation2 + $0x60] sm:$0xff]
    %v100 = vld [vmem:[#allocation2 + $0x68] sm:$0xff]
    %v101 = vld [vmem:[#allocation2 + $0x70] sm:$0xff]
    %v102 = vld [vmem:[#allocation2 + $0x78] sm:$0xff]
    %v103 = vld [vmem:[#allocation2 + $0x80] sm:$0xff]
    %v104 = vld [vmem:[#allocation2 + $0x88] sm:$0xff]
    %v105 = vld [vmem:[#allocation2 + $0x90] sm:$0xff]
    %v106 = vld [vmem:[#allocation2 + $0x98] sm:$0xff]
    %v107 = vld [vmem:[#allocation2 + $0xa0] sm:$0xff]
    %v108 = vld [vmem:[#allocation2 + $0xa8] sm:$0xff]
    %v109 = vld [vmem:[#allocation2 + $0xb0] sm:$0xff]
    %v110 = vld [vmem:[#allocation2 + $0xb8] sm:$0xff]
    %v111 = vld [vmem:[#allocation2 + $0xc0] sm:$0xff]
    %v112 = vld [vmem:[#allocation2 + $0xc8] sm:$0xff]
    %v113 = vld [vmem:[#allocation2 + $0xd0] sm:$0xff]
    %v114 = vld [vmem:[#allocation2 + $0xd8] sm:$0xff]
    %v115 = vld [vmem:[#allocation2 + $0xe0] sm:$0xff]
    %v116 = vld [vmem:[#allocation2 + $0xe8] sm:$0xff]
    %v117 = vld [vmem:[#allocation2 + $0xf0] sm:$0xff]
    %v118 = vld [vmem:[#allocation2 + $0xf8] sm:$0xff]
    %s119 = scalar_lea.vmem [#allocation5], 48
    %120 = vst.msk [vmem:[%s119 + $0x2] sm:$0xff] %vm25, %v87
    %121 = vst.msk [vmem:[%s119 + $0xa] sm:$0xff] %vm25, %v88
    %122 = vst.msk [vmem:[%s119 + $0x1a] sm:$0xff] %vm25, %v89
    %123 = vst.msk [vmem:[%s119 + $0x22] sm:$0xff] %vm25, %v90
    %124 = vst.msk [vmem:[%s119 + $0x32] sm:$0xff] %vm25, %v91
    %125 = vst.msk [vmem:[%s119 + $0x3a] sm:$0xff] %vm25, %v92
    %126 = vst.msk [vmem:[%s119 + $0x4a] sm:$0xff] %vm25, %v93
    %127 = vst.msk [vmem:[%s119 + $0x52] sm:$0xff] %vm25, %v94
    %128 = vst.msk [vmem:[%s119 + $0x62] sm:$0xff] %vm25, %v95
    %129 = vst.msk [vmem:[%s119 + $0x6a] sm:$0xff] %vm25, %v96
    %130 = vst.msk [vmem:[%s119 + $0x7a] sm:$0xff] %vm25, %v97
    %131 = vst.msk [vmem:[%s119 + $0x82] sm:$0xff] %vm25, %v98
    %132 = vst.msk [vmem:[%s119 + $0x92] sm:$0xff] %vm25, %v99
    %133 = vst.msk [vmem:[%s119 + $0x9a] sm:$0xff] %vm25, %v100
    %134 = vst.msk [vmem:[%s119 + $0xaa] sm:$0xff] %vm25, %v101
    %135 = vst.msk [vmem:[%s119 + $0xb2] sm:$0xff] %vm25, %v102
    %136 = vst.msk [vmem:[%s119 + $0xc2] sm:$0xff] %vm25, %v103
    %137 = vst.msk [vmem:[%s119 + $0xca] sm:$0xff] %vm25, %v104
    %138 = vst.msk [vmem:[%s119 + $0xda] sm:$0xff] %vm25, %v105
    %139 = vst.msk [vmem:[%s119 + $0xe2] sm:$0xff] %vm25, %v106
    %140 = vst.msk [vmem:[%s119 + $0xf2] sm:$0xff] %vm25, %v107
    %141 = vst.msk [vmem:[%s119 + $0xfa] sm:$0xff] %vm25, %v108
    %142 = vst.msk [vmem:[%s119 + $0x10a] sm:$0xff] %vm25, %v109
    %143 = vst.msk [vmem:[%s119 + $0x112] sm:$0xff] %vm25, %v110
    %144 = vst.msk [vmem:[%s119 + $0x122] sm:$0xff] %vm25, %v111
    %145 = vst.msk [vmem:[%s119 + $0x12a] sm:$0xff] %vm25, %v112
    %146 = vst.msk [vmem:[%s119 + $0x13a] sm:$0xff] %vm25, %v113
    %147 = vst.msk [vmem:[%s119 + $0x142] sm:$0xff] %vm25, %v114
    %148 = vst.msk [vmem:[%s119 + $0x152] sm:$0xff] %vm25, %v115
    %149 = vst.msk [vmem:[%s119 + $0x15a] sm:$0xff] %vm25, %v116
    %150 = vst.msk [vmem:[%s119 + $0x16a] sm:$0xff] %vm25, %v117
    %151 = vst.msk [vmem:[%s119 + $0x172] sm:$0xff] %vm25, %v118
    // Predicated region
    $region10: #{tpu_custom_call.1} parent=1 // pred_check
      _
    $region11: #{tpu_custom_call.1} parent=1 // pred_check_branch
      %153 = sbr.rel (0) target = $region13
    $region12: #{tpu_custom_call.1} parent=1 // pred_region
      %155 = vsyncadd [#allocation4], 0
      %s156 = sshll.u32 [#allocation5], 4
      %s157 = int_to_ptr.vmem [resolvable:$true] %s156
      %s158 = sshll.u32 %s1, 4
      %s159 = int_to_ptr.hbm [resolvable:$true] %s158
      %164 = dma.vmem_to_hbm [thread:$0]  %s157, 7680, %s159, [#allocation4], 128, 128, 8
    $region13: #{tpu_custom_call.1} parent=1 // pred_fallthru
      _
    // Predicated region
    $region14: #{tpu_custom_call.1} parent=1 // pred_check
      _
    $region15: #{tpu_custom_call.1} parent=1 // pred_check_branch
      %166 = sbr.rel (0) target = $region17
    $region16: #{tpu_custom_call.1} parent=1 // pred_region
      %168 = dma.done [#allocation4], 7680
    $region17: #{tpu_custom_call.1} parent=1 // pred_fallthru
      _
    %169 = vsyncpa [#allocation3], 1
    %170 = vsyncpa [#allocation4], 1

</llo_original>
